<compile_context>
chip_gen: v5e
topology: v5e:2x2
jax: 0.10.0
libtpu: 0.0.40
codegen_flags: <defaults>
</compile_context>

<pallas_src>
import jax
import jax.numpy as jnp
from jax.experimental import pallas as pl
from jax.experimental.pallas import tpu as pltpu

IMAGENET_MEAN = [0.485, 0.456, 0.406]
IMAGENET_STD = [0.229, 0.224, 0.225]


def get_imagenet_params(resol):
    """Replicates get_imagenet_params: (1, 3, R, R) mean / std tensors (NCHW)."""
    mean = jnp.stack(
        [jnp.full((resol, resol), IMAGENET_MEAN[i], dtype=jnp.float32) for i in range(3)]
    )[None]
    std = jnp.stack(
        [jnp.full((resol, resol), IMAGENET_STD[i], dtype=jnp.float32) for i in range(3)]
    )[None]
    return mean, std


def _round_up(v, m):
    return (v + m - 1) // m * m


def _pixel_model_kernel(x_ref, scale_ref, shift_ref, w_ref, b_ref, o_ref, acc_ref):
    """One (tm x tn) output tile, accumulated over the D (reduction) grid axis."""
    k_idx = pl.program_id(2)

    @pl.when(k_idx == 0)
    def _():
        acc_ref[...] = jnp.zeros_like(acc_ref)

    # ImagenetTransform fused to one FMA per element:
    #   (x/255 - mean)/std  ==  x * (1/(255*std)) - mean/std
    xn = x_ref[...] * scale_ref[...] - shift_ref[...]          # VPU, f32

    # MXU matmul with f32 accumulation; xn cast to W's (bf16) dtype for native MXU feed.
    acc_ref[...] += jnp.dot(
        xn.astype(w_ref.dtype), w_ref[...], preferred_element_type=jnp.float32
    )

    @pl.when(k_idx == pl.num_programs(2) - 1)
    def _():
        # Bias added exactly once, on the final reduction step.
        o_ref[...] = (acc_ref[...] + b_ref[...]).astype(o_ref.dtype)


def pixel_model_forward(
    x_nchw, mean_nchw, std_nchw, w, b,
    *, tm=128, tn=256, tk=512, w_dtype=jnp.bfloat16,
):
    """x_nchw: (N, 3, R, R) float32 in [0, 255]. Returns (N, num_classes) float32."""
    n, c, h, wd = x_nchw.shape
    d = c * h * wd
    k = w.shape[1]

    # ---- tile sizes (clipped for small problems; stay (8,128)-aligned) ----
    tm = min(tm, _round_up(n, 8))            # batch tile (sublane multiple of 8)
    k128 = _round_up(k, 128)                 # lane-dense output width
    tn = min(tn, k128)
    while k128 % tn != 0:
        tn //= 2
    d128 = _round_up(d, 128)
    tk = min(tk, d128)
    while d128 % tk != 0:                    # shrink tk rather than pad the (dominant) D axis
        tk //= 2

    n_pad = _round_up(n, tm)
    k_pad = k128
    d_pad = d128

    # ---- wrapper-side glue: flatten NCHW, precompute scale/shift, pad & cast ----
    x_flat = jnp.pad(x_nchw.reshape(n, d), ((0, n_pad - n), (0, d_pad - d)))
    scale = jnp.pad((1.0 / (255.0 * std_nchw)).reshape(1, d), ((0, 0), (0, d_pad - d)))
    shift = jnp.pad((mean_nchw / std_nchw).reshape(1, d), ((0, 0), (0, d_pad - d)))
    w_p = jnp.pad(w, ((0, d_pad - d), (0, k_pad - k))).astype(w_dtype)
    b_p = jnp.pad(b, (0, k_pad - k)).reshape(1, k_pad).astype(jnp.float32)

    grid = (n_pad // tm, k_pad // tn, d_pad // tk)

    cost = pl.CostEstimate(
        flops=2 * n_pad * d_pad * k_pad,
        transcendentals=0,
        bytes_accessed=(4 * n_pad * d_pad          # x
                        + w_p.dtype.itemsize * d_pad * k_pad   # W (bf16)
                        + 2 * 4 * d_pad            # scale + shift
                        + 4 * k_pad                # bias
                        + 4 * n_pad * k_pad),      # out
    )

    out = pl.pallas_call(
        _pixel_model_kernel,
        out_shape=jax.ShapeDtypeStruct((n_pad, k_pad), jnp.float32),
        grid_spec=pltpu.PrefetchScalarGridSpec(
            num_scalar_prefetch=0,
            grid=grid,
            in_specs=[
                pl.BlockSpec((tm, tk), lambda i, j, kk: (i, kk)),   # x tile
                pl.BlockSpec((1, tk), lambda i, j, kk: (0, kk)),    # scale (follows D tiling)
                pl.BlockSpec((1, tk), lambda i, j, kk: (0, kk)),    # shift (follows D tiling)
                pl.BlockSpec((tk, tn), lambda i, j, kk: (kk, j)),   # W tile (bf16)
                pl.BlockSpec((1, tn), lambda i, j, kk: (0, j)),     # bias (follows K tiling)
            ],
            out_specs=pl.BlockSpec((tm, tn), lambda i, j, kk: (i, j)),
            scratch_shapes=[pltpu.VMEM((tm, tn), jnp.float32)],     # f32 accumulator
        ),
        compiler_params=pltpu.CompilerParams(
            dimension_semantics=("parallel", "parallel", "arbitrary"),
            vmem_limit_bytes=48 * 1024 * 1024,   # above v5e's 16 MiB scoped default, under v7x's 64 MiB
        ),
        cost_estimate=cost,
    )(x_flat, scale, shift, w_p, b_p)

    return out[:n, :k]


if __name__ == "__main__":
    # Small shapes consistent with the module: batch=2, C=3 (ImageNet), resol=16.
    N, C, R = 2, 3, 16
    NUM_CLASSES = 8
    D = C * R * R

    key = jax.random.PRNGKey(0)
    kx, kw, kb = jax.random.split(key, 3)

    # Input image with pixels in [0, 255]
    x = jax.random.uniform(kx, (N, C, R, R), dtype=jnp.float32, minval=0.0, maxval=255.0)

    # Deterministic synthetic "model" parameters (linear head)
    w = jax.random.normal(kw, (D, NUM_CLASSES), dtype=jnp.float32) * 0.02
    b = jax.random.normal(kb, (NUM_CLASSES,), dtype=jnp.float32) * 0.02

    mean, std = get_imagenet_params(R)

    out = pixel_model_forward(x, mean, std, w, b)
    out = jax.block_until_ready(out)

    # Pure-JAX f32 reference of the fused semantics (kernel streams W in bf16 ->
    # relaxed tolerance; f32 accumulation keeps the error ~1e-3 at these shapes).
    xn_ref = (x / 255.0 - mean) / std
    ref = xn_ref.reshape(N, D) @ w + b
    assert out.shape == (N, NUM_CLASSES)
    assert jnp.allclose(out, ref, atol=5e-2, rtol=5e-2), "mismatch vs reference"

    print("KERNEL_OK")
</pallas_src>

<mosaic_0001>
module attributes {stable_mosaic.version = 11 : i64} {
  func.func @_pixel_model_kernel(%arg0: i32, %arg1: i32, %arg2: i32, %arg3: memref<8x256xf32, #tpu.memory_space<vmem>>, %arg4: memref<1x256xf32, #tpu.memory_space<vmem>>, %arg5: memref<1x256xf32, #tpu.memory_space<vmem>>, %arg6: memref<256x128xbf16, #tpu.memory_space<vmem>>, %arg7: memref<1x128xf32, #tpu.memory_space<vmem>>, %arg8: memref<8x128xf32, #tpu.memory_space<vmem>>, %arg9: memref<8x128xf32, #tpu.memory_space<vmem>>) attributes {dimension_semantics = [#tpu.dimension_semantics<parallel>, #tpu.dimension_semantics<parallel>, #tpu.dimension_semantics<arbitrary>], iteration_bounds = array<i64: 1, 1, 3>, scalar_prefetch = 0 : i64, scratch_operands = 1 : i64, tpu.core_type = #tpu.core_type<tc>, window_params = [{transform_indices = @transform_0, window_bounds = array<i64: 8, 256>}, {transform_indices = @transform_1, window_bounds = array<i64: 1, 256>}, {transform_indices = @transform_2, window_bounds = array<i64: 1, 256>}, {transform_indices = @transform_3, window_bounds = array<i64: 256, 128>}, {transform_indices = @transform_4, window_bounds = array<i64: 1, 128>}, {transform_indices = @transform_5, window_bounds = array<i64: 8, 128>}]} {
    %c0_i32 = arith.constant 0 : i32
    %0 = arith.cmpi eq, %arg2, %c0_i32 : i32
    %1 = arith.extui %0 : i1 to i32
    %c0_i32_0 = arith.constant 0 : i32
    %2 = arith.cmpi ne, %1, %c0_i32_0 : i32
    scf.if %2 {
      %cst_13 = arith.constant 0.000000e+00 : f32
      %19 = vector.broadcast %cst_13 : f32 to vector<8x128xf32>
      %c0_14 = arith.constant 0 : index
      %c0_15 = arith.constant 0 : index
      %20 = vector.load %arg9[%c0_14, %c0_15] : memref<8x128xf32, #tpu.memory_space<vmem>>, vector<8x128xf32>
      tpu.vector_store %arg9[%c0_14, %c0_15], %19 {strides = array<i32>} : memref<8x128xf32, #tpu.memory_space<vmem>>, vector<8x128xf32>,
    } else {
    }
    %c0 = arith.constant 0 : index
    %c0_1 = arith.constant 0 : index
    %3 = vector.load %arg3[%c0, %c0_1] : memref<8x256xf32, #tpu.memory_space<vmem>>, vector<8x256xf32>
    %c0_2 = arith.constant 0 : index
    %c0_3 = arith.constant 0 : index
    %4 = vector.load %arg4[%c0_2, %c0_3] : memref<1x256xf32, #tpu.memory_space<vmem>>, vector<1x256xf32>
    %5 = vector.broadcast %4 : vector<1x256xf32> to vector<8x256xf32>
    %6 = arith.mulf %3, %5 : vector<8x256xf32>
    %c0_4 = arith.constant 0 : index
    %c0_5 = arith.constant 0 : index
    %7 = vector.load %arg5[%c0_4, %c0_5] : memref<1x256xf32, #tpu.memory_space<vmem>>, vector<1x256xf32>
    %8 = vector.broadcast %7 : vector<1x256xf32> to vector<8x256xf32>
    %9 = arith.subf %6, %8 : vector<8x256xf32>
    %c0_6 = arith.constant 0 : index
    %c0_7 = arith.constant 0 : index
    %10 = vector.load %arg9[%c0_6, %c0_7] : memref<8x128xf32, #tpu.memory_space<vmem>>, vector<8x128xf32>
    %11 = arith.truncf %9 : vector<8x256xf32> to vector<8x256xbf16>
    %c0_8 = arith.constant 0 : index
    %c0_9 = arith.constant 0 : index
    %12 = vector.load %arg6[%c0_8, %c0_9] : memref<256x128xbf16, #tpu.memory_space<vmem>>, vector<256x128xbf16>
    %cst = arith.constant dense<0.000000e+00> : vector<8x128xf32>
    %13 = tpu.matmul %11, %12, %cst {dimension_numbers = #tpu.dot_dimension_numbers<[1], [0], [0], [1], [0, 0, 1, 1], [], []>} : vector<8x256xbf16>, vector<256x128xbf16>, vector<8x128xf32> -> vector<8x128xf32>
    %14 = arith.addf %10, %13 : vector<8x128xf32>
    %c0_10 = arith.constant 0 : index
    %c0_11 = arith.constant 0 : index
    %15 = vector.load %arg9[%c0_10, %c0_11] : memref<8x128xf32, #tpu.memory_space<vmem>>, vector<8x128xf32>
    tpu.vector_store %arg9[%c0_10, %c0_11], %14 {strides = array<i32>} : memref<8x128xf32, #tpu.memory_space<vmem>>, vector<8x128xf32>,
    %c2_i32 = arith.constant 2 : i32
    %16 = arith.cmpi eq, %arg2, %c2_i32 : i32
    %17 = arith.extui %16 : i1 to i32
    %c0_i32_12 = arith.constant 0 : i32
    %18 = arith.cmpi ne, %17, %c0_i32_12 : i32
    scf.if %18 {
      %c0_13 = arith.constant 0 : index
      %c0_14 = arith.constant 0 : index
      %19 = vector.load %arg9[%c0_13, %c0_14] : memref<8x128xf32, #tpu.memory_space<vmem>>, vector<8x128xf32>
      %c0_15 = arith.constant 0 : index
      %c0_16 = arith.constant 0 : index
      %20 = vector.load %arg7[%c0_15, %c0_16] : memref<1x128xf32, #tpu.memory_space<vmem>>, vector<1x128xf32>
      %21 = vector.broadcast %20 : vector<1x128xf32> to vector<8x128xf32>
      %22 = arith.addf %19, %21 : vector<8x128xf32>
      %c0_17 = arith.constant 0 : index
      %c0_18 = arith.constant 0 : index
      %23 = vector.load %arg8[%c0_17, %c0_18] : memref<8x128xf32, #tpu.memory_space<vmem>>, vector<8x128xf32>
      tpu.vector_store %arg8[%c0_17, %c0_18], %22 {strides = array<i32>} : memref<8x128xf32, #tpu.memory_space<vmem>>, vector<8x128xf32>,
    } else {
    }
    return
  }
  func.func @transform_0(%arg0: i32, %arg1: i32, %arg2: i32) -> (i32, i32) {
    %c0_i32 = arith.constant 0 : i32
    return %arg0, %arg2 : i32, i32
  }
  func.func @transform_1(%arg0: i32, %arg1: i32, %arg2: i32) -> (i32, i32) {
    %c0_i32 = arith.constant 0 : i32
    %c0_i32_0 = arith.constant 0 : i32
    return %c0_i32, %arg2 : i32, i32
  }
  func.func @transform_2(%arg0: i32, %arg1: i32, %arg2: i32) -> (i32, i32) {
    %c0_i32 = arith.constant 0 : i32
    %c0_i32_0 = arith.constant 0 : i32
    return %c0_i32, %arg2 : i32, i32
  }
  func.func @transform_3(%arg0: i32, %arg1: i32, %arg2: i32) -> (i32, i32) {
    %c0_i32 = arith.constant 0 : i32
    return %arg2, %arg1 : i32, i32
  }
  func.func @transform_4(%arg0: i32, %arg1: i32, %arg2: i32) -> (i32, i32) {
    %c0_i32 = arith.constant 0 : i32
    %c0_i32_0 = arith.constant 0 : i32
    return %c0_i32, %arg1 : i32, i32
  }
  func.func @transform_5(%arg0: i32, %arg1: i32, %arg2: i32) -> (i32, i32) {
    %c0_i32 = arith.constant 0 : i32
    return %arg0, %arg1 : i32, i32
  }
}

</mosaic_0001>

<llo_original>
// kernel: tpu_custom_call.1
$region0: #{tpu_custom_call.1}
  #allocation0 [shape = 'u32[]', space=smem, size = 0x4, offset = 0x4, fixed_abs, tag = 'smem constant byte address 0x4 - core index']
  #allocation1 [shape = 'u32[72,128]{1,0:T(1,128)}', space=vmem, size = 0x9000, scoped, tag = 'internal scratch']
  #allocation2 [shape = 'f32[8,128]{1,0:T(8,128)}', space=vmem, size = 0x1000, scoped, tag = 'scratch operand']
  %s0 = inlined_call_operand.hbm [shape: f32[8,768], index: 0, kind: input, shape index: {}]
  %s1 = inlined_call_operand.hbm [shape: f32[1,768], index: 1, kind: input, shape index: {}]
  %s2 = inlined_call_operand.hbm [shape: f32[1,768], index: 2, kind: input, shape index: {}]
  %s3 = inlined_call_operand.hbm [shape: bf16[768,128], index: 3, kind: input, shape index: {}]
  %s4 = inlined_call_operand.vmem [shape: f32[1,128], index: 4, kind: input, shape index: {}]
  %s5 = inlined_call_operand.hbm [shape: f32[8,128], index: 5, kind: output, shape index: {}]
  %s6 = sld [smem:[#allocation0]]
  $region77: #{tpu_custom_call.1} parent=0
    _
  %s8 = ssub.s32 1, %s6
  %s9 = scalar_select 0, %s8, %s6
  $region1: #{tpu_custom_call.1} parent=0
    #allocation3 [shape = 'u8[16384]{0}', space=vmem, size = 0x4000, scoped, tag = 'input window, operand 0']
    #allocation4 [shape = 's32[2]{0}', space=sflag, size = 0x8, scoped, tag = 'scoped memory for tpu_custom_call.1']
    #allocation5 [shape = 's32[2]{0}', space=sflag, size = 0x8, scoped, tag = 'scoped memory for tpu_custom_call.1']
    #allocation6 [shape = 'u8[2048]{0}', space=vmem, size = 0x800, scoped, tag = 'input window, operand 1']
    #allocation7 [shape = 's32[2]{0}', space=sflag, size = 0x8, scoped, tag = 'scoped memory for tpu_custom_call.1']
    #allocation8 [shape = 'u8[2048]{0}', space=vmem, size = 0x800, scoped, tag = 'input window, operand 2']
    #allocation9 [shape = 'u8[131072]{0}', space=vmem, size = 0x20000, scoped, tag = 'input window, operand 3']
    #allocation10 [shape = 's32[2]{0}', space=sflag, size = 0x8, scoped, tag = 'scoped memory for tpu_custom_call.1']
    #allocation11 [shape = 'u8[4096]{0}', space=vmem, size = 0x1000, scoped, tag = 'output window, operand 0, single buffered']
    %10 = vsyncpa [#allocation4], 0
    %s11 = scalar_lea.sflag [#allocation4], 1
    %12 = vsyncpa %s11, 0
    %13 = vsyncpa [#allocation7], 0
    %s14 = scalar_lea.sflag [#allocation7], 1
    %15 = vsyncpa %s14, 0
    %16 = vsyncpa [#allocation10], 0
    %s17 = scalar_lea.sflag [#allocation10], 1
    %18 = vsyncpa %s17, 0
    %19 = vsyncpa [#allocation5], 0
    loop: start=0, step=1, limit=5
    $region2: #{tpu_custom_call.1} parent=1 // loop_pre_header
      _
    $region3: #{tpu_custom_call.1} parent=1 // loop_header
      %s21 = sphi 0, %s25
      %p22 = scmp.ge.s32.totalorder %s21, 5
      %s28 = sphi 0, %s47
      %s29 = sphi 0, %s43
      %s30 = sphi 0, %s39
      %s31 = sphi 0, %s28
      %s32 = sphi 0, %s29
      %s33 = sphi 0, %s30
      %s34 = sphi 0, %s31
      %s35 = sphi 0, %s32
      %s36 = sphi 0, %s33
      %s52 = sphi 0, %s54
      %s55 = sphi 0, %s52
      %s56 = sphi 0, %s55
      %s72 = sphi 0, %s56
      %s78 = sphi 0, %s80
      %s81 = sphi 0, %s78
      %s82 = sphi 0, %s81
      %s98 = sphi 0, %s82
      %s104 = sphi 0, %s106
      %s107 = sphi 0, %s104
      %s108 = sphi 0, %s107
      %s124 = sphi 0, %s108
      %s132 = sphi 0, %s134
      %s135 = sphi 0, %s132
      %s136 = sphi 0, %s135
      %s152 = sphi 0, %s136
      %s158 = sphi 0, %s160
      %s161 = sphi 0, %s158
      %s162 = sphi 0, %s161
      %s178 = sphi 0, %s162
      %s186 = sphi 0, %s188
      %s189 = sphi 0, %s186
      %s190 = sphi 0, %s189
      %s206 = sphi 0, %s190
    $region4: #{tpu_custom_call.1} parent=1 // loop_header_branch
      %24 = sbr.rel (%p22) target = $region8
    $region5: #{tpu_custom_call.1} parent=1 // loop_body
      %s26 = ssub.s32 %s21, 1
      %s27 = ssub.s32 %s21, 2
      %s37 = sadd.s32 1, %s30
      %p38 = scmp.ge.s32.totalorder %s37, 3
      %s39 = scalar_select %p38, 0, %s37
      %s40 = sadd.s32 1, %s29
      %s41 = scalar_select %p38, %s40, %s29
      %p42 = scmp.ge.s32.totalorder %s41, 1
      %s43 = scalar_select %p42, 0, %s41
      %s44 = sadd.s32 1, %s28
      %s45 = scalar_select %p42, %s44, %s28
      %p46 = scmp.ge.s32.totalorder %s45, 1
      %s47 = scalar_select %p46, 0, %s45
      %s48 = ssub.s32 %s28, %s47
      %s49 = ssub.s32 %s30, %s39
      %s50 = sor.u32 %s48, %s49
      %p51 = scmp.eq.s32.totalorder %s50, 0
      %s53 = sadd.s32 %s52, 1
      %s54 = scalar_select %p51, %s52, %s53
      %p57 = pneg %p51
      %p58 = scmp.eq.s32.totalorder %s21, 2
      %p59 = por %p57, %p58
      %p60 = scmp.ne.s32.totalorder %s52, %s55
      %p61 = scmp.eq.s32.totalorder %s21, 0
      %p62 = por %p60, %p61
      %p63 = scmp.ne.s32.totalorder %s52, %s55
      %p64 = scmp.eq.s32.totalorder %s26, 2
      %p65 = por %p63, %p64
      %p66 = scmp.ne.s32.totalorder %s55, %s56
      %p67 = scmp.eq.s32.totalorder %s26, 0
      %p68 = por %p66, %p67
      %p69 = scmp.ne.s32.totalorder %s55, %s56
      %p70 = scmp.eq.s32.totalorder %s27, 2
      %p71 = por %p69, %p70
      %p73 = scmp.ne.s32.totalorder %s56, %s72
      %p74 = scmp.eq.s32.totalorder %s27, 0
      %p75 = por %p73, %p74
      %s76 = ssub.s32 %s30, %s39
      %p77 = scmp.eq.s32.totalorder %s76, 0
      %s79 = sadd.s32 %s78, 1
      %s80 = scalar_select %p77, %s78, %s79
      %p83 = pneg %p77
      %p84 = scmp.eq.s32.totalorder %s21, 2
      %p85 = por %p83, %p84
      %p86 = scmp.ne.s32.totalorder %s78, %s81
      %p87 = scmp.eq.s32.totalorder %s21, 0
      %p88 = por %p86, %p87
      %p89 = scmp.ne.s32.totalorder %s78, %s81
      %p90 = scmp.eq.s32.totalorder %s26, 2
      %p91 = por %p89, %p90
      %p92 = scmp.ne.s32.totalorder %s81, %s82
      %p93 = scmp.eq.s32.totalorder %s26, 0
      %p94 = por %p92, %p93
      %p95 = scmp.ne.s32.totalorder %s81, %s82
      %p96 = scmp.eq.s32.totalorder %s27, 2
      %p97 = por %p95, %p96
      %p99 = scmp.ne.s32.totalorder %s82, %s98
      %p100 = scmp.eq.s32.totalorder %s27, 0
      %p101 = por %p99, %p100
      %s102 = ssub.s32 %s30, %s39
      %p103 = scmp.eq.s32.totalorder %s102, 0
      %s105 = sadd.s32 %s104, 1
      %s106 = scalar_select %p103, %s104, %s105
      %p109 = pneg %p103
      %p110 = scmp.eq.s32.totalorder %s21, 2
      %p111 = por %p109, %p110
      %p112 = scmp.ne.s32.totalorder %s104, %s107
      %p113 = scmp.eq.s32.totalorder %s21, 0
      %p114 = por %p112, %p113
      %p115 = scmp.ne.s32.totalorder %s104, %s107
      %p116 = scmp.eq.s32.totalorder %s26, 2
      %p117 = por %p115, %p116
      %p118 = scmp.ne.s32.totalorder %s107, %s108
      %p119 = scmp.eq.s32.totalorder %s26, 0
      %p120 = por %p118, %p119
      %p121 = scmp.ne.s32.totalorder %s107, %s108
      %p122 = scmp.eq.s32.totalorder %s27, 2
      %p123 = por %p121, %p122
      %p125 = scmp.ne.s32.totalorder %s108, %s124
      %p126 = scmp.eq.s32.totalorder %s27, 0
      %p127 = por %p125, %p126
      %s128 = ssub.s32 %s30, %s39
      %s129 = ssub.s32 %s29, %s43
      %s130 = sor.u32 %s128, %s129
      %p131 = scmp.eq.s32.totalorder %s130, 0
      %s133 = sadd.s32 %s132, 1
      %s134 = scalar_select %p131, %s132, %s133
      %p137 = pneg %p131
      %p138 = scmp.eq.s32.totalorder %s21, 2
      %p139 = por %p137, %p138
      %p140 = scmp.ne.s32.totalorder %s132, %s135
      %p141 = scmp.eq.s32.totalorder %s21, 0
      %p142 = por %p140, %p141
      %p143 = scmp.ne.s32.totalorder %s132, %s135
      %p144 = scmp.eq.s32.totalorder %s26, 2
      %p145 = por %p143, %p144
      %p146 = scmp.ne.s32.totalorder %s135, %s136
      %p147 = scmp.eq.s32.totalorder %s26, 0
      %p148 = por %p146, %p147
      %p149 = scmp.ne.s32.totalorder %s135, %s136
      %p150 = scmp.eq.s32.totalorder %s27, 2
      %p151 = por %p149, %p150
      %p153 = scmp.ne.s32.totalorder %s136, %s152
      %p154 = scmp.eq.s32.totalorder %s27, 0
      %p155 = por %p153, %p154
      %s156 = ssub.s32 %s29, %s43
      %p157 = scmp.eq.s32.totalorder %s156, 0
      %s159 = sadd.s32 %s158, 1
      %s160 = scalar_select %p157, %s158, %s159
      %p163 = pneg %p157
      %p164 = scmp.eq.s32.totalorder %s21, 2
      %p165 = por %p163, %p164
      %p166 = scmp.ne.s32.totalorder %s158, %s161
      %p167 = scmp.eq.s32.totalorder %s21, 0
      %p168 = por %p166, %p167
      %p169 = scmp.ne.s32.totalorder %s158, %s161
      %p170 = scmp.eq.s32.totalorder %s26, 2
      %p171 = por %p169, %p170
      %p172 = scmp.ne.s32.totalorder %s161, %s162
      %p173 = scmp.eq.s32.totalorder %s26, 0
      %p174 = por %p172, %p173
      %p175 = scmp.ne.s32.totalorder %s161, %s162
      %p176 = scmp.eq.s32.totalorder %s27, 2
      %p177 = por %p175, %p176
      %p179 = scmp.ne.s32.totalorder %s162, %s178
      %p180 = scmp.eq.s32.totalorder %s27, 0
      %p181 = por %p179, %p180
      %s182 = ssub.s32 %s28, %s47
      %s183 = ssub.s32 %s29, %s43
      %s184 = sor.u32 %s182, %s183
      %p185 = scmp.eq.s32.totalorder %s184, 0
      %s187 = sadd.s32 %s186, 1
      %s188 = scalar_select %p185, %s186, %s187
      %p191 = pneg %p185
      %p192 = scmp.eq.s32.totalorder %s21, 2
      %p193 = por %p191, %p192
      %p194 = scmp.ne.s32.totalorder %s186, %s189
      %p195 = scmp.eq.s32.totalorder %s21, 0
      %p196 = por %p194, %p195
      %p197 = scmp.ne.s32.totalorder %s186, %s189
      %p198 = scmp.eq.s32.totalorder %s26, 2
      %p199 = por %p197, %p198
      %p200 = scmp.ne.s32.totalorder %s189, %s190
      %p201 = scmp.eq.s32.totalorder %s26, 0
      %p202 = por %p200, %p201
      %p203 = scmp.ne.s32.totalorder %s189, %s190
      %p204 = scmp.eq.s32.totalorder %s27, 2
      %p205 = por %p203, %p204
      %p207 = scmp.ne.s32.totalorder %s190, %s206
      %p208 = scmp.eq.s32.totalorder %s27, 0
      %p209 = por %p207, %p208
      %p210 = scmp.le.s32.totalorder 1, %s21
      %p211 = scmp.lt.s32.totalorder %s21, 4
      %p212 = pnand %p210, %p211
      %p213 = pneg %p212
      // Predicated region
      $region9: #{tpu_custom_call.1} parent=5 // pred_check
        _
      $region10: #{tpu_custom_call.1} parent=5 // pred_check_branch
        %215 = sbr.rel (%p212) target = $region12
      $region11: #{tpu_custom_call.1} parent=5 // pred_region
        %s216 = ssub.s32 %s21, 1
        // Predicated region
        $region13: #{tpu_custom_call.1} parent=11 // pred_check
          %p217 = pneg %p174
        $region14: #{tpu_custom_call.1} parent=11 // pred_check_branch
          %219 = sbr.rel (%p217) target = $region16
        $region15: #{tpu_custom_call.1} parent=11 // pred_region
          %p220 = scmp.lt.s32.totalorder %s32, 0
          %s221 = scalar_select %p220, %s32, 0
          %s222 = scalar_lea.vmem %s4, %s221
        $region16: #{tpu_custom_call.1} parent=11 // pred_fallthru
          _
      $region12: #{tpu_custom_call.1} parent=5 // pred_fallthru
        _
      %p223 = scmp.lt.s32.totalorder %s21, 3
      // Predicated region
      $region17: #{tpu_custom_call.1} parent=5 // pred_check
        %p224 = pneg %p223
      $region18: #{tpu_custom_call.1} parent=5 // pred_check_branch
        %226 = sbr.rel (%p224) target = $region20
      $region19: #{tpu_custom_call.1} parent=5 // pred_region
        // Predicated region
        $region21: #{tpu_custom_call.1} parent=19 // pred_check
          %p227 = pneg %p62
        $region22: #{tpu_custom_call.1} parent=19 // pred_check_branch
          %229 = sbr.rel (%p227) target = $region24
        $region23: #{tpu_custom_call.1} parent=19 // pred_region
          %s230 = sand.u32 %s52, 1
          %s231 = scalar_lea.sflag [#allocation4], %s230
          %s232 = sand.u32 %s52, 1
          %s233 = smul.addr %s232, 16
          %s234 = scalar_lea.vmem [#allocation3], %s233
          %s235 = smul.u32 2, %s30
          %237 = vsyncadd %s231, 0
          %s238 = smul.addr %s28, 6
          %s239 = sadd.s32 %s235, %s238
          %s240 = smul.addr %s239, 8
          %s241 = scalar_lea.hbm %s0, %s240
          %s243 = sshll.u32 %s241, 4
          %s244 = int_to_ptr.hbm [resolvable:$true] %s243
          %s245 = sshll.u32 %s234, 4
          %s246 = int_to_ptr.vmem [resolvable:$true] %s245
          %248 = dma.hbm_to_vmem [thread:$0]  %s244, 256, %s246, %s231
        $region24: #{tpu_custom_call.1} parent=19 // pred_fallthru
          _
        // Predicated region
        $region25: #{tpu_custom_call.1} parent=19 // pred_check
          %p249 = pneg %p88
        $region26: #{tpu_custom_call.1} parent=19 // pred_check_branch
          %251 = sbr.rel (%p249) target = $region28
        $region27: #{tpu_custom_call.1} parent=19 // pred_region
          %s252 = sand.u32 %s21, 1
          %s253 = scalar_lea.sflag [#allocation7], %s252
          %s254 = sand.u32 %s78, 1
          %s255 = smul.addr %s254, 2
          %s256 = scalar_lea.vmem [#allocation6], %s255
          %s257 = smul.u32 2, %s30
          %259 = vsyncadd %s253, 0
          %s260 = scalar_lea.hbm %s1, %s257
          %s262 = sshll.u32 %s260, 4
          %s263 = int_to_ptr.hbm [resolvable:$true] %s262
          %s264 = sshll.u32 %s256, 4
          %s265 = int_to_ptr.vmem [resolvable:$true] %s264
          %267 = dma.hbm_to_vmem [thread:$0]  %s263, 32, %s265, %s253
        $region28: #{tpu_custom_call.1} parent=19 // pred_fallthru
          _
        // Predicated region
        $region29: #{tpu_custom_call.1} parent=19 // pred_check
          %p268 = pneg %p114
        $region30: #{tpu_custom_call.1} parent=19 // pred_check_branch
          %270 = sbr.rel (%p268) target = $region32
        $region31: #{tpu_custom_call.1} parent=19 // pred_region
          %s271 = sand.u32 %s21, 1
          %s272 = scalar_lea.sflag [#allocation7], %s271
          %s273 = sand.u32 %s104, 1
          %s274 = smul.addr %s273, 2
          %s275 = scalar_lea.vmem [#allocation8], %s274
          %s276 = smul.u32 2, %s30
          %278 = vsyncadd %s272, 0
          %s279 = scalar_lea.hbm %s2, %s276
          %s281 = sshll.u32 %s279, 4
          %s282 = int_to_ptr.hbm [resolvable:$true] %s281
          %s283 = sshll.u32 %s275, 4
          %s284 = int_to_ptr.vmem [resolvable:$true] %s283
          %286 = dma.hbm_to_vmem [thread:$0]  %s282, 32, %s284, %s272
        $region32: #{tpu_custom_call.1} parent=19 // pred_fallthru
          _
        // Predicated region
        $region33: #{tpu_custom_call.1} parent=19 // pred_check
          %p287 = pneg %p142
        $region34: #{tpu_custom_call.1} parent=19 // pred_check_branch
          %289 = sbr.rel (%p287) target = $region36
        $region35: #{tpu_custom_call.1} parent=19 // pred_region
          %s290 = sand.u32 %s132, 1
          %s291 = scalar_lea.sflag [#allocation10], %s290
          %s292 = sand.u32 %s132, 1
          %s293 = smul.addr %s292, 128
          %s294 = scalar_lea.vmem [#allocation9], %s293
          %s295 = smul.u32 32, %s30
          %297 = vsyncadd %s291, 0
          %s298 = sadd.s32 %s29, %s295
          %s299 = smul.addr %s298, 4
          %s300 = scalar_lea.hbm %s3, %s299
          %s301 = sshll.u32 %s300, 4
          %s302 = int_to_ptr.hbm [resolvable:$true] %s301
          %s303 = sshll.u32 %s294, 4
          %s304 = int_to_ptr.vmem [resolvable:$true] %s303
          %309 = dma.hbm_to_vmem [thread:$0]  %s302, 2048, %s304, %s291, 64, 64, 4
        $region36: #{tpu_custom_call.1} parent=19 // pred_fallthru
          _
      $region20: #{tpu_custom_call.1} parent=5 // pred_fallthru
        _
      %p310 = scmp.le.s32.totalorder 1, %s21
      %p311 = scmp.lt.s32.totalorder %s21, 4
      %p312 = pnand %p310, %p311
      %p313 = pneg %p312
      // Predicated region
      $region37: #{tpu_custom_call.1} parent=5 // pred_check
        _
      $region38: #{tpu_custom_call.1} parent=5 // pred_check_branch
        %315 = sbr.rel (%p312) target = $region40
      $region39: #{tpu_custom_call.1} parent=5 // pred_region
        %s316 = ssub.s32 %s21, 1
        %s317 = sand.u32 %s55, 1
        %s318 = scalar_lea.sflag [#allocation4], %s317
        %s319 = sand.u32 %s55, 1
        %s320 = smul.addr %s319, 16
        %s321 = scalar_lea.vmem [#allocation3], %s320
        // Predicated region
        $region41: #{tpu_custom_call.1} parent=39 // pred_check
          %p322 = pneg %p68
        $region42: #{tpu_custom_call.1} parent=39 // pred_check_branch
          %324 = sbr.rel (%p322) target = $region44
        $region43: #{tpu_custom_call.1} parent=39 // pred_region
          %326 = dma.done %s318, 256
        $region44: #{tpu_custom_call.1} parent=39 // pred_fallthru
          _
        %s327 = sand.u32 %s26, 1
        %s328 = scalar_lea.sflag [#allocation7], %s327
        %s329 = sand.u32 %s81, 1
        %s330 = smul.addr %s329, 2
        %s331 = scalar_lea.vmem [#allocation6], %s330
        // Predicated region
        $region45: #{tpu_custom_call.1} parent=39 // pred_check
          %p332 = pneg %p94
        $region46: #{tpu_custom_call.1} parent=39 // pred_check_branch
          %334 = sbr.rel (%p332) target = $region48
        $region47: #{tpu_custom_call.1} parent=39 // pred_region
          %336 = dma.done %s328, 32
        $region48: #{tpu_custom_call.1} parent=39 // pred_fallthru
          _
        %s337 = sand.u32 %s26, 1
        %s338 = scalar_lea.sflag [#allocation7], %s337
        %s339 = sand.u32 %s107, 1
        %s340 = smul.addr %s339, 2
        %s341 = scalar_lea.vmem [#allocation8], %s340
        // Predicated region
        $region49: #{tpu_custom_call.1} parent=39 // pred_check
          %p342 = pneg %p120
        $region50: #{tpu_custom_call.1} parent=39 // pred_check_branch
          %344 = sbr.rel (%p342) target = $region52
        $region51: #{tpu_custom_call.1} parent=39 // pred_region
          %346 = dma.done %s338, 32
        $region52: #{tpu_custom_call.1} parent=39 // pred_fallthru
          _
        %s347 = sand.u32 %s135, 1
        %s348 = scalar_lea.sflag [#allocation10], %s347
        %s349 = sand.u32 %s135, 1
        %s350 = smul.addr %s349, 128
        %s351 = scalar_lea.vmem [#allocation9], %s350
        // Predicated region
        $region53: #{tpu_custom_call.1} parent=39 // pred_check
          %p352 = pneg %p148
        $region54: #{tpu_custom_call.1} parent=39 // pred_check_branch
          %354 = sbr.rel (%p352) target = $region56
        $region55: #{tpu_custom_call.1} parent=39 // pred_region
          %356 = dma.done %s348, 2048
        $region56: #{tpu_custom_call.1} parent=39 // pred_fallthru
          _
        %s357 = sand.u32 %s55, 1
        %s358 = scalar_lea.sflag [#allocation4], %s357
        %s359 = sand.u32 %s55, 1
        %s360 = smul.addr %s359, 16
        %s361 = scalar_lea.vmem [#allocation3], %s360
        %p362 = pneg %p68
        %p363 = pneg %p65
        %s364 = sand.u32 %s26, 1
        %s365 = scalar_lea.sflag [#allocation7], %s364
        %s366 = sand.u32 %s81, 1
        %s367 = smul.addr %s366, 2
        %s368 = scalar_lea.vmem [#allocation6], %s367
        %p369 = pneg %p94
        %p370 = pneg %p91
        %s371 = sand.u32 %s26, 1
        %s372 = scalar_lea.sflag [#allocation7], %s371
        %s373 = sand.u32 %s107, 1
        %s374 = smul.addr %s373, 2
        %s375 = scalar_lea.vmem [#allocation8], %s374
        %p376 = pneg %p120
        %p377 = pneg %p117
        %s378 = sand.u32 %s135, 1
        %s379 = scalar_lea.sflag [#allocation10], %s378
        %s380 = sand.u32 %s135, 1
        %s381 = smul.addr %s380, 128
        %s382 = scalar_lea.vmem [#allocation9], %s381
        %p383 = pneg %p148
        %p384 = pneg %p145
        %p385 = scmp.lt.s32.totalorder %s32, 0
        %s386 = scalar_select %p385, %s32, 0
        %s387 = scalar_lea.vmem %s4, %s386
        %p388 = pneg %p174
        %p389 = pneg %p171
        %p390 = pneg %p202
        %p391 = pneg %p199
        %s392 = smul.u32 2, %s33
        %s393 = smul.u32 2, %s33
        %s394 = smul.u32 2, %s33
        %s395 = smul.u32 32, %s33
        %p396 = scmp.lt.s32.totalorder %s32, 0
        %s397 = scalar_select %p396, %s32, 0
        %s398 = scalar_lea.vmem %s4, %s397
        %p399 = scmp.eq.s32.totalorder %s33, 0
        // Predicated region
        $region57: #{tpu_custom_call.1} parent=39 // pred_check
          %p400 = pneg %p399
        $region58: #{tpu_custom_call.1} parent=39 // pred_check_branch
          %402 = sbr.rel (%p400) target = $region60
        $region59: #{tpu_custom_call.1} parent=39 // pred_region
          %403 = vst [vmem:[#allocation2] sm:$0xff] 0.0
        $region60: #{tpu_custom_call.1} parent=39 // pred_fallthru
          _
        %v404 = vld [vmem:[%s321] sm:$0xff]
        %v405 = vld [vmem:[%s321 + $0x8] sm:$0xff]
        %v406 = vld [vmem:[%s331] sm:$0x3]
        %v408 = vperm.slane %v406, 0
        %v409 = vperm.slane %v406, 1
        %v412 = vmul.f32 %v404, %v408
        %v413 = vmul.f32 %v405, %v409
        %v414 = vld [vmem:[%s341] sm:$0x3]
        %v416 = vperm.slane %v414, 0
        %v417 = vperm.slane %v414, 1
        %v420 = vsub.f32 %v412, %v416
        %v421 = vsub.f32 %v413, %v417
        %v422 = vld [vmem:[#allocation2] sm:$0xff]
        %v423 = vpack.c.bf16 %v420, %v420
        %v424 = vpack.c.bf16 %v421, %v421
        %v425 = vld [vmem:[%s351] sm:$0xf]
        %v426 = vld [vmem:[%s351 + $0x4] sm:$0xf]
        %v427 = vld [vmem:[%s351 + $0x8] sm:$0xf]
        %v428 = vld [vmem:[%s351 + $0xc] sm:$0xf]
        %v429 = vld [vmem:[%s351 + $0x10] sm:$0xf]
        %v430 = vld [vmem:[%s351 + $0x14] sm:$0xf]
        %v431 = vld [vmem:[%s351 + $0x18] sm:$0xf]
        %v432 = vld [vmem:[%s351 + $0x1c] sm:$0xf]
        %v433 = vld [vmem:[%s351 + $0x20] sm:$0xf]
        %v434 = vld [vmem:[%s351 + $0x24] sm:$0xf]
        %v435 = vld [vmem:[%s351 + $0x28] sm:$0xf]
        %v436 = vld [vmem:[%s351 + $0x2c] sm:$0xf]
        %v437 = vld [vmem:[%s351 + $0x30] sm:$0xf]
        %v438 = vld [vmem:[%s351 + $0x34] sm:$0xf]
        %v439 = vld [vmem:[%s351 + $0x38] sm:$0xf]
        %v440 = vld [vmem:[%s351 + $0x3c] sm:$0xf]
        %v441 = vld [vmem:[%s351 + $0x40] sm:$0xf]
        %v442 = vld [vmem:[%s351 + $0x44] sm:$0xf]
        %v443 = vld [vmem:[%s351 + $0x48] sm:$0xf]
        %v444 = vld [vmem:[%s351 + $0x4c] sm:$0xf]
        %v445 = vld [vmem:[%s351 + $0x50] sm:$0xf]
        %v446 = vld [vmem:[%s351 + $0x54] sm:$0xf]
        %v447 = vld [vmem:[%s351 + $0x58] sm:$0xf]
        %v448 = vld [vmem:[%s351 + $0x5c] sm:$0xf]
        %v449 = vld [vmem:[%s351 + $0x60] sm:$0xf]
        %v450 = vld [vmem:[%s351 + $0x64] sm:$0xf]
        %v451 = vld [vmem:[%s351 + $0x68] sm:$0xf]
        %v452 = vld [vmem:[%s351 + $0x6c] sm:$0xf]
        %v453 = vld [vmem:[%s351 + $0x70] sm:$0xf]
        %v454 = vld [vmem:[%s351 + $0x74] sm:$0xf]
        %v455 = vld [vmem:[%s351 + $0x78] sm:$0xf]
        %v456 = vld [vmem:[%s351 + $0x7c] sm:$0xf]
        %v489 = vunpack.c.l.b16 %v425
        %v490 = vunpack.c.l.b16 %v426
        %v491 = vunpack.c.l.b16 %v427
        %v492 = vunpack.c.l.b16 %v428
        %v493 = vunpack.c.l.b16 %v429
        %v494 = vunpack.c.l.b16 %v430
        %v495 = vunpack.c.l.b16 %v431
        %v496 = vunpack.c.l.b16 %v432
        %v497 = vunpack.c.l.b16 %v433
        %v498 = vunpack.c.l.b16 %v434
        %v499 = vunpack.c.l.b16 %v435
        %v500 = vunpack.c.l.b16 %v436
        %v501 = vunpack.c.l.b16 %v437
        %v502 = vunpack.c.l.b16 %v438
        %v503 = vunpack.c.l.b16 %v439
        %v504 = vunpack.c.l.b16 %v440
        %v505 = vunpack.c.l.b16 %v441
        %v506 = vunpack.c.l.b16 %v442
        %v507 = vunpack.c.l.b16 %v443
        %v508 = vunpack.c.l.b16 %v444
        %v509 = vunpack.c.l.b16 %v445
        %v510 = vunpack.c.l.b16 %v446
        %v511 = vunpack.c.l.b16 %v447
        %v512 = vunpack.c.l.b16 %v448
        %v513 = vunpack.c.l.b16 %v449
        %v514 = vunpack.c.l.b16 %v450
        %v515 = vunpack.c.l.b16 %v451
        %v516 = vunpack.c.l.b16 %v452
        %v517 = vunpack.c.l.b16 %v453
        %v518 = vunpack.c.l.b16 %v454
        %v519 = vunpack.c.l.b16 %v455
        %v520 = vunpack.c.l.b16 %v456
        %v521 = vpack.c.b16 %v490, %v489
        %v522 = vpack.c.b16 %v492, %v491
        %v523 = vpack.c.b16 %v494, %v493
        %v524 = vpack.c.b16 %v496, %v495
        %v525 = vpack.c.b16 %v498, %v497
        %v526 = vpack.c.b16 %v500, %v499
        %v527 = vpack.c.b16 %v502, %v501
        %v528 = vpack.c.b16 %v504, %v503
        %v529 = vpack.c.b16 %v506, %v505
        %v530 = vpack.c.b16 %v508, %v507
        %v531 = vpack.c.b16 %v510, %v509
        %v532 = vpack.c.b16 %v512, %v511
        %v533 = vpack.c.b16 %v514, %v513
        %v534 = vpack.c.b16 %v516, %v515
        %v535 = vpack.c.b16 %v518, %v517
        %v536 = vpack.c.b16 %v520, %v519
        %553 = vmatpush.bf16.msra.mxu0 %v528
        %554 = vmatpush.bf16.msra.mxu0 %v527
        %555 = vmatpush.bf16.msra.mxu0 %v526
        %556 = vmatpush.bf16.msra.mxu0 %v525
        %557 = vmatpush.bf16.msra.mxu0 %v524
        %558 = vmatpush.bf16.msra.mxu0 %v523
        %559 = vmatpush.bf16.msra.mxu0 %v522
        %560 = vmatpush.bf16.msra.mxu0 %v521
        %561 = vmatmul.bf16.gmra.mxu0 %v423
        %v562 = vpop.f32.mrf.mxu0
        %v563 = vadd.f32 0.0, %v562
        %v564 = vpop.f32.mrf.mxu0
        %565 = vdwg.mxu0
        %566 = vmatpush.bf16.msra.mxu0 %v536
        %567 = vmatpush.bf16.msra.mxu0 %v535
        %568 = vmatpush.bf16.msra.mxu0 %v534
        %569 = vmatpush.bf16.msra.mxu0 %v533
        %570 = vmatpush.bf16.msra.mxu0 %v532
        %571 = vmatpush.bf16.msra.mxu0 %v531
        %572 = vmatpush.bf16.msra.mxu0 %v530
        %573 = vmatpush.bf16.msra.mxu0 %v529
        %574 = vmatmul.bf16.gmra.mxu0 %v424
        %v575 = vpop.f32.mrf.mxu0
        %v576 = vadd.f32 %v563, %v575
        %v577 = vpop.f32.mrf.mxu0
        %578 = vdwg.mxu0
        %v579 = vadd.f32 %v422, %v576
        %580 = vst [vmem:[#allocation2] sm:$0xff] %v579
        %p581 = scmp.eq.s32.totalorder %s33, 2
        // Predicated region
        $region61: #{tpu_custom_call.1} parent=39 // pred_check
          %p582 = pneg %p581
        $region62: #{tpu_custom_call.1} parent=39 // pred_check_branch
          %584 = sbr.rel (%p582) target = $region64
        $region63: #{tpu_custom_call.1} parent=39 // pred_region
          %v585 = vld [vmem:[#allocation2] sm:$0xff]
          %v586 = vld [vmem:[%s398] sm:$0x1]
          %v588 = vperm.slane %v586, 0
          %v590 = vadd.f32 %v585, %v588
          %591 = vst [vmem:[#allocation11] sm:$0xff] %v590
        $region64: #{tpu_custom_call.1} parent=39 // pred_fallthru
          _
        // Predicated region
        $region65: #{tpu_custom_call.1} parent=39 // pred_check
          %p592 = pneg %p199
        $region66: #{tpu_custom_call.1} parent=39 // pred_check_branch
          %594 = sbr.rel (%p592) target = $region68
        $region67: #{tpu_custom_call.1} parent=39 // pred_region
          %596 = vsyncadd [#allocation5], 0
          %s597 = sadd.s32 %s32, %s31
          %s598 = smul.addr %s597, 8
          %s599 = scalar_lea.hbm %s5, %s598
          %s601 = sshll.u32 [#allocation11], 4
          %s602 = int_to_ptr.vmem [resolvable:$true] %s601
          %s603 = sshll.u32 %s599, 4
          %s604 = int_to_ptr.hbm [resolvable:$true] %s603
          %606 = dma.vmem_to_hbm [thread:$0]  %s602, 128, %s604, [#allocation5]
        $region68: #{tpu_custom_call.1} parent=39 // pred_fallthru
          _
        // Predicated region
        $region69: #{tpu_custom_call.1} parent=39 // pred_check
          %p607 = pneg %p199
        $region70: #{tpu_custom_call.1} parent=39 // pred_check_branch
          %609 = sbr.rel (%p607) target = $region72
        $region71: #{tpu_custom_call.1} parent=39 // pred_region
          %611 = dma.done [#allocation5], 128
        $region72: #{tpu_custom_call.1} parent=39 // pred_fallthru
          _
      $region40: #{tpu_custom_call.1} parent=5 // pred_fallthru
        _
      %p612 = scmp.le.s32.totalorder 2, %s21
      // Predicated region
      $region73: #{tpu_custom_call.1} parent=5 // pred_check
        %p613 = pneg %p612
      $region74: #{tpu_custom_call.1} parent=5 // pred_check_branch
        %615 = sbr.rel (%p613) target = $region76
      $region75: #{tpu_custom_call.1} parent=5 // pred_region
        %s616 = ssub.s32 %s21, 2
      $region76: #{tpu_custom_call.1} parent=5 // pred_fallthru
        _
    $region6: #{tpu_custom_call.1} parent=1 // loop_footer
      %s25 = sadd.s32 1, %s21
    $region7: #{tpu_custom_call.1} parent=1 // loop_footer_branch
      %20 = sbr.rel target = $region3
    $region8: #{tpu_custom_call.1} parent=1 // loop_exit
      _
    %617 = vsyncpa [#allocation4], 1
    %s618 = scalar_lea.sflag [#allocation4], 1
    %619 = vsyncpa %s618, 1
    %620 = vsyncpa [#allocation7], 1
    %s621 = scalar_lea.sflag [#allocation7], 1
    %622 = vsyncpa %s621, 1
    %623 = vsyncpa [#allocation10], 1
    %s624 = scalar_lea.sflag [#allocation10], 1
    %625 = vsyncpa %s624, 1
    %626 = vsyncpa [#allocation5], 1
    %s627 = scalar_lea.sflag [#allocation5], 1
    %628 = vsyncpa %s627, 1

</llo_original>
